<compile_context>
chip_gen: v5e
topology: v5e:2x2
jax: 0.10.0
libtpu: 0.0.40
codegen_flags: <defaults>
</compile_context>

<pallas_src>
import functools
import math

import jax
import jax.numpy as jnp
from jax.experimental import pallas as pl
from jax.experimental.pallas import tpu as pltpu

_VMEM_PIPELINE_BUDGET = 24 * 1024 * 1024   # 2x in + 2x out blocks + f32 temps
_PER_BLOCK_TARGET_BYTES = 4 * 1024 * 1024  # ~plateau of the HBM roofline
_MAX_TILE_ROWS = 1024
_MIN_GRID_STEPS = 8                        # pipelining + v7x 2-TC sharding


@functools.lru_cache(maxsize=None)
def _scoped_vmem_limit():
    """Scoped VMEM limit: ~half of physical capacity, clamped to [32, 64] MiB."""
    cap = 0
    try:
        cap = int(getattr(pltpu.get_tpu_info(), "vmem_capacity_bytes", 0) or 0)
    except Exception:
        cap = 0
    if cap <= 0:
        cap = 64 * 1024 * 1024  # conservative (v7x per-TC physical VMEM)
    return int(min(max(cap // 2, 32 * 1024 * 1024), 64 * 1024 * 1024))


def _choose_tile_rows(rows, width, itemsize, sub):
    """Largest sublane-aligned row tile that fits the budget and keeps >=8 steps."""
    bytes_per_row_io = width * itemsize
    # The kernel upcasts the whole block to f32 and keeps the centered copy
    # live across two reductions: ~2 full-tile f32 temps.
    f32_bytes_per_row = 2 * 4 * width
    per_row = 4 * bytes_per_row_io + f32_bytes_per_row   # 2 in + 2 out + temps
    rows_fit = _VMEM_PIPELINE_BUDGET // max(1, per_row)
    rows_block = _PER_BLOCK_TARGET_BYTES // max(1, bytes_per_row_io)
    sub_blocks = int(pl.cdiv(rows, sub))
    rows_steps = sub * int(pl.cdiv(sub_blocks, _MIN_GRID_STEPS))
    tile = min(int(rows_fit), int(rows_block), _MAX_TILE_ROWS,
               int(rows_steps), sub_blocks * sub)
    tile = max(sub, (int(tile) // sub) * sub)
    return int(tile)


def _ln_rows_kernel(x_ref, w_ref, b_ref, o_ref, *, eps):
    """One LayerNorm row per sublane row; reduce over the full lane (last) dim."""
    x = x_ref[...].astype(jnp.float32)
    mean = jnp.mean(x, axis=-1, keepdims=True)
    c = x - mean
    # Two-pass variance kept (more stable than E[x^2]-mean^2); XLU reductions
    # have slack in this HBM-bound kernel and the f32 temps are budgeted.
    var = jnp.mean(c * c, axis=-1, keepdims=True)
    inv = jax.lax.rsqrt(var + eps)
    w = w_ref[...].astype(jnp.float32)
    b = b_ref[...].astype(jnp.float32)
    o_ref[...] = (c * inv * w + b).astype(o_ref.dtype)


def _ln_folded_kernel(x_ref, w_ref, b_ref, o_ref, *, eps, seg, lanes):
    """LayerNorm for small hidden sizes: G = lanes//seg rows folded per lane row.

    Each aligned `seg`-wide group of lanes is one independent LayerNorm row.
    Per-segment sums (broadcast back to every lane of the segment) are computed
    with one MXU matmul against a constant block-diagonal ones matrix -- the
    MXU is otherwise idle here, so loads/compute/stores stay lane-dense and the
    kernel remains HBM-bound (no XLU butterfly, no masked partial stores).
    """
    x = x_ref[...].astype(jnp.float32)

    # S[i, j] = 1 iff lanes i and j belong to the same seg-wide segment.
    # seg is a power of two (128 % seg == 0), so use shifts for the segment id.
    shift = int(math.log2(seg))
    ri = jax.lax.broadcasted_iota(jnp.int32, (lanes, lanes), 0) >> shift
    ci = jax.lax.broadcasted_iota(jnp.int32, (lanes, lanes), 1) >> shift
    s_mat = (ri == ci).astype(jnp.float32)

    def seg_sum(v):
        return jnp.dot(v, s_mat, preferred_element_type=jnp.float32,
                       precision=jax.lax.Precision.HIGHEST)

    inv_seg = jnp.float32(1.0 / seg)
    mean = seg_sum(x) * inv_seg
    c = x - mean
    var = seg_sum(c * c) * inv_seg
    inv = jax.lax.rsqrt(var + eps)
    w = w_ref[...].astype(jnp.float32)
    b = b_ref[...].astype(jnp.float32)
    o_ref[...] = (c * inv * w + b).astype(o_ref.dtype)


def layer_norm(x, weight, bias, eps=1e-5):
    """LayerNorm matching F.layer_norm over the trailing dims of `weight`."""
    weight = jnp.asarray(weight)
    bias = jnp.asarray(bias)
    norm_ndim = weight.ndim
    if tuple(x.shape[-norm_ndim:]) != tuple(weight.shape):
        raise ValueError("normalized_shape mismatch between x and weight")
    H = int(math.prod(weight.shape))
    orig_shape = x.shape
    R = int(math.prod(orig_shape[:-norm_ndim])) if len(orig_shape) > norm_ndim else 1

    x2 = x.reshape(R, H)
    w2 = weight.reshape(1, H)
    b2 = bias.reshape(1, H)

    itemsize = jnp.dtype(x.dtype).itemsize
    sub = {4: 8, 2: 16, 1: 32}.get(itemsize, 8)   # sublane packing per dtype

    # Lane-dense layout for small hidden sizes: fold G = 128 // H rows into one
    # 128-wide lane row. If R is not a multiple of G, pad a handful of rows
    # (zeros, sliced off afterwards) rather than losing the fold.
    fold = (H < 128) and (128 % H == 0)
    if fold:
        grp = 128 // H
        r_pad = int(pl.cdiv(R, grp)) * grp
        if r_pad != R:
            x2 = jnp.pad(x2, ((0, r_pad - R), (0, 0)))
        rows, width = r_pad // grp, 128
        xk = x2.reshape(rows, width)              # row-major fold, zero-copy
        wk = jnp.tile(w2, (1, grp))
        bk = jnp.tile(b2, (1, grp))
        kernel = functools.partial(_ln_folded_kernel, eps=float(eps),
                                   seg=H, lanes=width)
    else:
        rows, width = R, H
        xk, wk, bk = x2, w2, b2
        kernel = functools.partial(_ln_rows_kernel, eps=float(eps))

    tile_rows = _choose_tile_rows(rows, width, itemsize, sub)
    grid = (int(pl.cdiv(rows, tile_rows)),)       # ragged last block is masked

    out = pl.pallas_call(
        kernel,
        out_shape=jax.ShapeDtypeStruct((rows, width), x.dtype),
        grid=grid,
        in_specs=[
            pl.BlockSpec((tile_rows, width), lambda i: (i, 0)),
            pl.BlockSpec((1, width), lambda i: (0, 0)),
            pl.BlockSpec((1, width), lambda i: (0, 0)),
        ],
        out_specs=pl.BlockSpec((tile_rows, width), lambda i: (i, 0)),
        compiler_params=pltpu.CompilerParams(
            dimension_semantics=("parallel",),    # shard rows across v7x's 2 TCs
            vmem_limit_bytes=_scoped_vmem_limit(),
        ),
    )(xk, wk, bk)

    if fold:
        out = out.reshape(-1, H)[:R]
    return out.reshape(orig_shape)


class LayerNorm:
    """Mirrors the PyTorch module forward, incl. the (input, embedding) tuple path."""

    def __init__(self, normalized_shape, eps=1e-5, elementwise_affine=True,
                 dtype=jnp.float32):
        if isinstance(normalized_shape, int):
            normalized_shape = (normalized_shape,)
        self.normalized_shape = tuple(normalized_shape)
        self.eps = eps
        self.elementwise_affine = elementwise_affine
        # reset_parameters(): ones / zeros (also the correct values when affine
        # is disabled, since F.layer_norm with weight=None behaves identically).
        self.weight = jnp.ones(self.normalized_shape, dtype)
        self.bias = jnp.zeros(self.normalized_shape, dtype)

    def __call__(self, input, embedding=None):
        if isinstance(input, tuple):
            input, embedding = input
            return layer_norm(input, self.weight, self.bias, self.eps), embedding
        assert embedding is None
        return layer_norm(input, self.weight, self.bias, self.eps)


if __name__ == "__main__":
    key = jax.random.PRNGKey(0)

    def ref_ln(x, w, b, eps):
        mean = jnp.mean(x, axis=-1, keepdims=True)
        var = jnp.mean((x - mean) ** 2, axis=-1, keepdims=True)
        return (x - mean) * jax.lax.rsqrt(var + eps) * w + b

    # Case 1: small hidden (lane-dense folded path), module-style shapes.
    batch, seq, hidden = 2, 8, 32
    k1, k2, k3, k4, k5 = jax.random.split(key, 5)
    x1 = jax.random.normal(k1, (batch, seq, hidden), dtype=jnp.float32)
    w1 = 1.0 + 0.1 * jax.random.normal(k2, (hidden,), dtype=jnp.float32)
    b1 = 0.1 * jax.random.normal(k3, (hidden,), dtype=jnp.float32)
    y1 = layer_norm(x1, w1, b1, eps=1e-5)
    jax.block_until_ready(y1)
    assert jnp.allclose(y1, ref_ln(x1, w1, b1, 1e-5), atol=2e-5, rtol=2e-5), \
        "folded-path mismatch vs reference"

    # Case 1b: folded path where the row count needs padding to the fold group.
    x1b = jax.random.normal(k5, (3, 5, hidden), dtype=jnp.float32)   # R=15, grp=4
    y1b = layer_norm(x1b, w1, b1, eps=1e-5)
    jax.block_until_ready(y1b)
    assert jnp.allclose(y1b, ref_ln(x1b, w1, b1, 1e-5), atol=2e-5, rtol=2e-5), \
        "folded-path (padded rows) mismatch vs reference"

    # Case 2: larger hidden (per-row path) with a ragged row count.
    x2 = jax.random.normal(k4, (3, 5, 256), dtype=jnp.float32)
    w2 = jnp.ones((256,), dtype=jnp.float32)
    b2 = jnp.zeros((256,), dtype=jnp.float32)
    y2 = layer_norm(x2, w2, b2, eps=1e-5)
    jax.block_until_ready(y2)
    assert jnp.allclose(y2, ref_ln(x2, w2, b2, 1e-5), atol=2e-5, rtol=2e-5), \
        "row-path mismatch vs reference"

    # Module-style call, including the (input, embedding) tuple passthrough.
    ln = LayerNorm(hidden)
    out, emb = ln((x1, "emb"))
    jax.block_until_ready(out)
    assert emb == "emb"
    assert jnp.allclose(out, ref_ln(x1, ln.weight, ln.bias, 1e-5),
                        atol=2e-5, rtol=2e-5), "module-call mismatch vs reference"

    print("KERNEL_OK")
</pallas_src>

<mosaic_0001>
module attributes {stable_mosaic.version = 11 : i64} {
  func.func @_ln_folded_kernel(%arg0: i32, %arg1: memref<8x128xf32, #tpu.memory_space<vmem>>, %arg2: memref<1x128xf32, #tpu.memory_space<vmem>>, %arg3: memref<1x128xf32, #tpu.memory_space<vmem>>, %arg4: memref<8x128xf32, #tpu.memory_space<vmem>>) attributes {dimension_semantics = [#tpu.dimension_semantics<parallel>], iteration_bounds = array<i64: 1>, scalar_prefetch = 0 : i64, scratch_operands = 0 : i64, tpu.core_type = #tpu.core_type<tc>, window_params = [{transform_indices = @transform_0, window_bounds = array<i64: 8, 128>}, {pipeline_mode = #tpu.pipeline_mode<synchronous>, transform_indices = @transform_1, window_bounds = array<i64: 1, 128>}, {pipeline_mode = #tpu.pipeline_mode<synchronous>, transform_indices = @transform_2, window_bounds = array<i64: 1, 128>}, {transform_indices = @transform_3, window_bounds = array<i64: 8, 128>}]} {
    %c0 = arith.constant 0 : index
    %c0_0 = arith.constant 0 : index
    %0 = vector.load %arg1[%c0, %c0_0] : memref<8x128xf32, #tpu.memory_space<vmem>>, vector<8x128xf32>
    %1 = tpu.iota {dimensions = array<i32: 0>} : vector<128x128xi32>
    %c5_i32 = arith.constant 5 : i32
    %2 = vector.broadcast %c5_i32 : i32 to vector<128x128xi32>
    %3 = arith.shrsi %1, %2 : vector<128x128xi32>
    %4 = tpu.iota {dimensions = array<i32: 1>} : vector<128x128xi32>
    %c5_i32_1 = arith.constant 5 : i32
    %5 = vector.broadcast %c5_i32_1 : i32 to vector<128x128xi32>
    %6 = arith.shrsi %4, %5 : vector<128x128xi32>
    %7 = arith.cmpi eq, %3, %6 : vector<128x128xi32>
    %8 = arith.extui %7 : vector<128x128xi1> to vector<128x128xi32>
    %9 = arith.sitofp %8 : vector<128x128xi32> to vector<128x128xf32>
    %cst = arith.constant dense<0.000000e+00> : vector<8x128xf32>
    %10 = tpu.matmul %0, %9, %cst {dimension_numbers = #tpu.dot_dimension_numbers<[1], [0], [0], [1], [0, 0, 1, 1], [], []>, precision = #tpu.contract_precision<fp32>} : vector<8x128xf32>, vector<128x128xf32>, vector<8x128xf32> -> vector<8x128xf32>
    %cst_2 = arith.constant 3.125000e-02 : f32
    %11 = vector.broadcast %cst_2 : f32 to vector<8x128xf32>
    %12 = arith.mulf %10, %11 : vector<8x128xf32>
    %13 = arith.subf %0, %12 : vector<8x128xf32>
    %14 = arith.mulf %13, %13 : vector<8x128xf32>
    %cst_3 = arith.constant dense<0.000000e+00> : vector<8x128xf32>
    %15 = tpu.matmul %14, %9, %cst_3 {dimension_numbers = #tpu.dot_dimension_numbers<[1], [0], [0], [1], [0, 0, 1, 1], [], []>, precision = #tpu.contract_precision<fp32>} : vector<8x128xf32>, vector<128x128xf32>, vector<8x128xf32> -> vector<8x128xf32>
    %cst_4 = arith.constant 3.125000e-02 : f32
    %16 = vector.broadcast %cst_4 : f32 to vector<8x128xf32>
    %17 = arith.mulf %15, %16 : vector<8x128xf32>
    %cst_5 = arith.constant 9.99999974E-6 : f32
    %18 = vector.broadcast %cst_5 : f32 to vector<8x128xf32>
    %19 = arith.addf %17, %18 : vector<8x128xf32>
    %20 = math.rsqrt %19 : vector<8x128xf32>
    %c0_6 = arith.constant 0 : index
    %c0_7 = arith.constant 0 : index
    %21 = vector.load %arg2[%c0_6, %c0_7] : memref<1x128xf32, #tpu.memory_space<vmem>>, vector<1x128xf32>
    %c0_8 = arith.constant 0 : index
    %c0_9 = arith.constant 0 : index
    %22 = vector.load %arg3[%c0_8, %c0_9] : memref<1x128xf32, #tpu.memory_space<vmem>>, vector<1x128xf32>
    %23 = arith.mulf %13, %20 : vector<8x128xf32>
    %24 = vector.broadcast %21 : vector<1x128xf32> to vector<8x128xf32>
    %25 = arith.mulf %23, %24 : vector<8x128xf32>
    %26 = vector.broadcast %22 : vector<1x128xf32> to vector<8x128xf32>
    %27 = arith.addf %25, %26 : vector<8x128xf32>
    %c0_10 = arith.constant 0 : index
    %c0_11 = arith.constant 0 : index
    %28 = vector.load %arg4[%c0_10, %c0_11] : memref<8x128xf32, #tpu.memory_space<vmem>>, vector<8x128xf32>
    tpu.vector_store %arg4[%c0_10, %c0_11], %27 {strides = array<i32>} : memref<8x128xf32, #tpu.memory_space<vmem>>, vector<8x128xf32>,
    return
  }
  func.func @transform_0(%arg0: i32) -> (i32, i32) {
    %c0_i32 = arith.constant 0 : i32
    %c0_i32_0 = arith.constant 0 : i32
    return %arg0, %c0_i32 : i32, i32
  }
  func.func @transform_1(%arg0: i32) -> (i32, i32) {
    %c0_i32 = arith.constant 0 : i32
    %c0_i32_0 = arith.constant 0 : i32
    %c0_i32_1 = arith.constant 0 : i32
    return %c0_i32, %c0_i32_0 : i32, i32
  }
  func.func @transform_2(%arg0: i32) -> (i32, i32) {
    %c0_i32 = arith.constant 0 : i32
    %c0_i32_0 = arith.constant 0 : i32
    %c0_i32_1 = arith.constant 0 : i32
    return %c0_i32, %c0_i32_0 : i32, i32
  }
  func.func @transform_3(%arg0: i32) -> (i32, i32) {
    %c0_i32 = arith.constant 0 : i32
    %c0_i32_0 = arith.constant 0 : i32
    return %arg0, %c0_i32 : i32, i32
  }
}

</mosaic_0001>

<llo_original>
// kernel: tpu_custom_call.1
$region0: #{tpu_custom_call.1}
  #allocation0 [shape = 'u32[]', space=smem, size = 0x4, offset = 0x4, fixed_abs, tag = 'smem constant byte address 0x4 - core index']
  #allocation1 [shape = 'u32[72,128]{1,0:T(1,128)}', space=vmem, size = 0x9000, scoped, tag = 'internal scratch']
  %s0 = inlined_call_operand.hbm [shape: f32[4,128], index: 0, kind: input, shape index: {}]
  %s1 = inlined_call_operand.hbm [shape: f32[1,128], index: 1, kind: input, shape index: {}]
  %s2 = inlined_call_operand.vmem [shape: f32[1,128], index: 2, kind: input, shape index: {}]
  %s3 = inlined_call_operand.hbm [shape: f32[4,128], index: 3, kind: output, shape index: {}]
  %s4 = sld [smem:[#allocation0]]
  $region30: #{tpu_custom_call.1} parent=0
    _
  %s6 = ssub.s32 1, %s4
  %s7 = scalar_select 0, %s6, %s4
  $region1: #{tpu_custom_call.1} parent=0
    #allocation2 [shape = 'u8[4096]{0}', space=vmem, size = 0x1000, scoped, tag = 'input window, operand 0, single buffered']
    #allocation3 [shape = 's32[1]{0}', space=sflag, size = 0x4, scoped, tag = 'scoped memory for tpu_custom_call.1']
    #allocation4 [shape = 's32[1]{0}', space=sflag, size = 0x4, scoped, tag = 'scoped memory for tpu_custom_call.1']
    #allocation5 [shape = 'u8[512]{0}', space=vmem, size = 0x400, scoped, tag = 'input window, operand 1, single buffered']
    #allocation6 [shape = 's32[1]{0}', space=sflag, size = 0x4, scoped, tag = 'scoped memory for tpu_custom_call.1']
    #allocation7 [shape = 'u8[4096]{0}', space=vmem, size = 0x1000, scoped, tag = 'output window, operand 0, single buffered']
    %8 = vsyncpa [#allocation3], 0
    %9 = vsyncpa [#allocation6], 0
    %10 = vsyncpa [#allocation4], 0
    // Predicated region
    $region2: #{tpu_custom_call.1} parent=1 // pred_check
      _
    $region3: #{tpu_custom_call.1} parent=1 // pred_check_branch
      %12 = sbr.rel (0) target = $region5
    $region4: #{tpu_custom_call.1} parent=1 // pred_region
      %14 = vsyncadd [#allocation3], 64
      %s15 = sshll.u32 %s0, 4
      %s16 = int_to_ptr.hbm [resolvable:$true] %s15
      %s17 = sshll.u32 [#allocation2], 4
      %s18 = int_to_ptr.vmem [resolvable:$true] %s17
      %23 = dma.hbm_to_vmem [thread:$0]  %s16, 64, %s18, [#allocation3], 64, 64, 4
    $region5: #{tpu_custom_call.1} parent=1 // pred_fallthru
      _
    // Predicated region
    $region6: #{tpu_custom_call.1} parent=1 // pred_check
      _
    $region7: #{tpu_custom_call.1} parent=1 // pred_check_branch
      %25 = sbr.rel (0) target = $region9
    $region8: #{tpu_custom_call.1} parent=1 // pred_region
      %27 = vsyncadd [#allocation6], 0
      %s29 = sshll.u32 %s1, 4
      %s30 = int_to_ptr.hbm [resolvable:$true] %s29
      %s31 = sshll.u32 [#allocation5], 4
      %s32 = int_to_ptr.vmem [resolvable:$true] %s31
      %34 = dma.hbm_to_vmem [thread:$0]  %s30, 16, %s32, [#allocation6]
    $region9: #{tpu_custom_call.1} parent=1 // pred_fallthru
      _
    // Predicated region
    $region10: #{tpu_custom_call.1} parent=1 // pred_check
      _
    $region11: #{tpu_custom_call.1} parent=1 // pred_check_branch
      %36 = sbr.rel (0) target = $region13
    $region12: #{tpu_custom_call.1} parent=1 // pred_region
      _
    $region13: #{tpu_custom_call.1} parent=1 // pred_fallthru
      _
    // Predicated region
    $region14: #{tpu_custom_call.1} parent=1 // pred_check
      _
    $region15: #{tpu_custom_call.1} parent=1 // pred_check_branch
      %38 = sbr.rel (0) target = $region17
    $region16: #{tpu_custom_call.1} parent=1 // pred_region
      %40 = dma.done [#allocation3], 128
    $region17: #{tpu_custom_call.1} parent=1 // pred_fallthru
      _
    // Predicated region
    $region18: #{tpu_custom_call.1} parent=1 // pred_check
      _
    $region19: #{tpu_custom_call.1} parent=1 // pred_check_branch
      %42 = sbr.rel (0) target = $region21
    $region20: #{tpu_custom_call.1} parent=1 // pred_region
      %44 = dma.done [#allocation6], 16
    $region21: #{tpu_custom_call.1} parent=1 // pred_fallthru
      _
    %v45 = vld [vmem:[#allocation2] sm:$0xff]
    %v46 = vlaneseq
    %v47 = vshrl.u32 %v46, 7
    %v48 = vadd.s32 %v47, 8
    %v49 = vadd.s32 %v47, 16
    %v50 = vadd.s32 %v47, 24
    %v51 = vadd.s32 %v47, 32
    %v52 = vadd.s32 %v47, 40
    %v53 = vadd.s32 %v47, 48
    %v54 = vadd.s32 %v47, 56
    %v55 = vadd.s32 %v47, 64
    %v56 = vadd.s32 %v47, 72
    %v57 = vadd.s32 %v47, 80
    %v58 = vadd.s32 %v47, 88
    %v59 = vadd.s32 %v47, 96
    %v60 = vadd.s32 %v47, 104
    %v61 = vadd.s32 %v47, 112
    %v62 = vadd.s32 %v47, 120
    %v63 = vshra.s32 %v47, 5
    %v64 = vshra.s32 %v48, 5
    %v65 = vshra.s32 %v49, 5
    %v66 = vshra.s32 %v50, 5
    %v67 = vshra.s32 %v51, 5
    %v68 = vshra.s32 %v52, 5
    %v69 = vshra.s32 %v53, 5
    %v70 = vshra.s32 %v54, 5
    %v71 = vshra.s32 %v55, 5
    %v72 = vshra.s32 %v56, 5
    %v73 = vshra.s32 %v57, 5
    %v74 = vshra.s32 %v58, 5
    %v75 = vshra.s32 %v59, 5
    %v76 = vshra.s32 %v60, 5
    %v77 = vshra.s32 %v61, 5
    %v78 = vshra.s32 %v62, 5
    %v79 = vlaneseq
    %v80 = vand.u32 %v79, 127
    %v81 = vshra.s32 %v80, 5
    %vm82 = vcmp.eq.s32.totalorder %v63, %v81
    %vm83 = vcmp.eq.s32.totalorder %v64, %v81
    %vm84 = vcmp.eq.s32.totalorder %v65, %v81
    %vm85 = vcmp.eq.s32.totalorder %v66, %v81
    %vm86 = vcmp.eq.s32.totalorder %v67, %v81
    %vm87 = vcmp.eq.s32.totalorder %v68, %v81
    %vm88 = vcmp.eq.s32.totalorder %v69, %v81
    %vm89 = vcmp.eq.s32.totalorder %v70, %v81
    %vm90 = vcmp.eq.s32.totalorder %v71, %v81
    %vm91 = vcmp.eq.s32.totalorder %v72, %v81
    %vm92 = vcmp.eq.s32.totalorder %v73, %v81
    %vm93 = vcmp.eq.s32.totalorder %v74, %v81
    %vm94 = vcmp.eq.s32.totalorder %v75, %v81
    %vm95 = vcmp.eq.s32.totalorder %v76, %v81
    %vm96 = vcmp.eq.s32.totalorder %v77, %v81
    %vm97 = vcmp.eq.s32.totalorder %v78, %v81
    %v98 = vsel %vm82, 1, 0
    %v99 = vsel %vm83, 1, 0
    %v100 = vsel %vm84, 1, 0
    %v101 = vsel %vm85, 1, 0
    %v102 = vsel %vm86, 1, 0
    %v103 = vsel %vm87, 1, 0
    %v104 = vsel %vm88, 1, 0
    %v105 = vsel %vm89, 1, 0
    %v106 = vsel %vm90, 1, 0
    %v107 = vsel %vm91, 1, 0
    %v108 = vsel %vm92, 1, 0
    %v109 = vsel %vm93, 1, 0
    %v110 = vsel %vm94, 1, 0
    %v111 = vsel %vm95, 1, 0
    %v112 = vsel %vm96, 1, 0
    %v113 = vsel %vm97, 1, 0
    %v114 = vcvt.s32.f32 %v98
    %v115 = vcvt.s32.f32 %v99
    %v116 = vcvt.s32.f32 %v100
    %v117 = vcvt.s32.f32 %v101
    %v118 = vcvt.s32.f32 %v102
    %v119 = vcvt.s32.f32 %v103
    %v120 = vcvt.s32.f32 %v104
    %v121 = vcvt.s32.f32 %v105
    %v122 = vcvt.s32.f32 %v106
    %v123 = vcvt.s32.f32 %v107
    %v124 = vcvt.s32.f32 %v108
    %v125 = vcvt.s32.f32 %v109
    %v126 = vcvt.s32.f32 %v110
    %v127 = vcvt.s32.f32 %v111
    %v128 = vcvt.s32.f32 %v112
    %v129 = vcvt.s32.f32 %v113
    %v130 = vand.u32 %v129, 4294901760
    %131 = vmatpush.msra.mxu0 %v130
    %v132 = vand.u32 %v128, 4294901760
    %133 = vmatpush.msra.mxu0 %v132
    %v134 = vand.u32 %v127, 4294901760
    %135 = vmatpush.msra.mxu0 %v134
    %v136 = vand.u32 %v126, 4294901760
    %137 = vmatpush.msra.mxu0 %v136
    %v138 = vand.u32 %v125, 4294901760
    %139 = vmatpush.msra.mxu0 %v138
    %v140 = vand.u32 %v124, 4294901760
    %141 = vmatpush.msra.mxu0 %v140
    %v142 = vand.u32 %v123, 4294901760
    %143 = vmatpush.msra.mxu0 %v142
    %v144 = vand.u32 %v122, 4294901760
    %145 = vmatpush.msra.mxu0 %v144
    %v146 = vand.u32 %v121, 4294901760
    %147 = vmatpush.msra.mxu0 %v146
    %v148 = vand.u32 %v120, 4294901760
    %149 = vmatpush.msra.mxu0 %v148
    %v150 = vand.u32 %v119, 4294901760
    %151 = vmatpush.msra.mxu0 %v150
    %v152 = vand.u32 %v118, 4294901760
    %153 = vmatpush.msra.mxu0 %v152
    %v154 = vand.u32 %v117, 4294901760
    %155 = vmatpush.msra.mxu0 %v154
    %v156 = vand.u32 %v116, 4294901760
    %157 = vmatpush.msra.mxu0 %v156
    %v158 = vand.u32 %v115, 4294901760
    %159 = vmatpush.msra.mxu0 %v158
    %v160 = vand.u32 %v114, 4294901760
    %161 = vmatpush.msra.mxu0 %v160
    %v162 = vand.u32 %v45, 4294901760
    %v163 = vsub.f32 %v45, %v162
    %v164 = vand.u32 %v163, 4294901760
    %v165 = vsub.f32 %v163, %v164
    %v166 = vand.u32 %v165, 4294901760
    %167 = vmatmul.f32.gmra.mxu0 %v166
    %v168 = vpop.f32.mrf.mxu0
    %v169 = vadd.f32 0.0, %v168
    %170 = vdwg.mxu0
    %v171 = vand.u32 %v129, 4294901760
    %v172 = vsub.f32 %v129, %v171
    %v173 = vand.u32 %v172, 4294901760
    %v174 = vsub.f32 %v172, %v173
    %v175 = vand.u32 %v174, 4294901760
    %176 = vmatpush.msra.mxu0 %v175
    %v177 = vand.u32 %v128, 4294901760
    %v178 = vsub.f32 %v128, %v177
    %v179 = vand.u32 %v178, 4294901760
    %v180 = vsub.f32 %v178, %v179
    %v181 = vand.u32 %v180, 4294901760
    %182 = vmatpush.msra.mxu0 %v181
    %v183 = vand.u32 %v127, 4294901760
    %v184 = vsub.f32 %v127, %v183
    %v185 = vand.u32 %v184, 4294901760
    %v186 = vsub.f32 %v184, %v185
    %v187 = vand.u32 %v186, 4294901760
    %188 = vmatpush.msra.mxu0 %v187
    %v189 = vand.u32 %v126, 4294901760
    %v190 = vsub.f32 %v126, %v189
    %v191 = vand.u32 %v190, 4294901760
    %v192 = vsub.f32 %v190, %v191
    %v193 = vand.u32 %v192, 4294901760
    %194 = vmatpush.msra.mxu0 %v193
    %v195 = vand.u32 %v125, 4294901760
    %v196 = vsub.f32 %v125, %v195
    %v197 = vand.u32 %v196, 4294901760
    %v198 = vsub.f32 %v196, %v197
    %v199 = vand.u32 %v198, 4294901760
    %200 = vmatpush.msra.mxu0 %v199
    %v201 = vand.u32 %v124, 4294901760
    %v202 = vsub.f32 %v124, %v201
    %v203 = vand.u32 %v202, 4294901760
    %v204 = vsub.f32 %v202, %v203
    %v205 = vand.u32 %v204, 4294901760
    %206 = vmatpush.msra.mxu0 %v205
    %v207 = vand.u32 %v123, 4294901760
    %v208 = vsub.f32 %v123, %v207
    %v209 = vand.u32 %v208, 4294901760
    %v210 = vsub.f32 %v208, %v209
    %v211 = vand.u32 %v210, 4294901760
    %212 = vmatpush.msra.mxu0 %v211
    %v213 = vand.u32 %v122, 4294901760
    %v214 = vsub.f32 %v122, %v213
    %v215 = vand.u32 %v214, 4294901760
    %v216 = vsub.f32 %v214, %v215
    %v217 = vand.u32 %v216, 4294901760
    %218 = vmatpush.msra.mxu0 %v217
    %v219 = vand.u32 %v121, 4294901760
    %v220 = vsub.f32 %v121, %v219
    %v221 = vand.u32 %v220, 4294901760
    %v222 = vsub.f32 %v220, %v221
    %v223 = vand.u32 %v222, 4294901760
    %224 = vmatpush.msra.mxu0 %v223
    %v225 = vand.u32 %v120, 4294901760
    %v226 = vsub.f32 %v120, %v225
    %v227 = vand.u32 %v226, 4294901760
    %v228 = vsub.f32 %v226, %v227
    %v229 = vand.u32 %v228, 4294901760
    %230 = vmatpush.msra.mxu0 %v229
    %v231 = vand.u32 %v119, 4294901760
    %v232 = vsub.f32 %v119, %v231
    %v233 = vand.u32 %v232, 4294901760
    %v234 = vsub.f32 %v232, %v233
    %v235 = vand.u32 %v234, 4294901760
    %236 = vmatpush.msra.mxu0 %v235
    %v237 = vand.u32 %v118, 4294901760
    %v238 = vsub.f32 %v118, %v237
    %v239 = vand.u32 %v238, 4294901760
    %v240 = vsub.f32 %v238, %v239
    %v241 = vand.u32 %v240, 4294901760
    %242 = vmatpush.msra.mxu0 %v241
    %v243 = vand.u32 %v117, 4294901760
    %v244 = vsub.f32 %v117, %v243
    %v245 = vand.u32 %v244, 4294901760
    %v246 = vsub.f32 %v244, %v245
    %v247 = vand.u32 %v246, 4294901760
    %248 = vmatpush.msra.mxu0 %v247
    %v249 = vand.u32 %v116, 4294901760
    %v250 = vsub.f32 %v116, %v249
    %v251 = vand.u32 %v250, 4294901760
    %v252 = vsub.f32 %v250, %v251
    %v253 = vand.u32 %v252, 4294901760
    %254 = vmatpush.msra.mxu0 %v253
    %v255 = vand.u32 %v115, 4294901760
    %v256 = vsub.f32 %v115, %v255
    %v257 = vand.u32 %v256, 4294901760
    %v258 = vsub.f32 %v256, %v257
    %v259 = vand.u32 %v258, 4294901760
    %260 = vmatpush.msra.mxu0 %v259
    %v261 = vand.u32 %v114, 4294901760
    %v262 = vsub.f32 %v114, %v261
    %v263 = vand.u32 %v262, 4294901760
    %v264 = vsub.f32 %v262, %v263
    %v265 = vand.u32 %v264, 4294901760
    %266 = vmatpush.msra.mxu0 %v265
    %v267 = vand.u32 %v45, 4294901760
    %268 = vmatmul.f32.gmra.mxu0 %v267
    %v269 = vpop.f32.mrf.mxu0
    %v270 = vadd.f32 %v169, %v269
    %271 = vdwg.mxu0
    %v272 = vand.u32 %v129, 4294901760
    %v273 = vsub.f32 %v129, %v272
    %274 = vmatpush.msra.mxu0 %v273
    %v275 = vand.u32 %v128, 4294901760
    %v276 = vsub.f32 %v128, %v275
    %277 = vmatpush.msra.mxu0 %v276
    %v278 = vand.u32 %v127, 4294901760
    %v279 = vsub.f32 %v127, %v278
    %280 = vmatpush.msra.mxu0 %v279
    %v281 = vand.u32 %v126, 4294901760
    %v282 = vsub.f32 %v126, %v281
    %283 = vmatpush.msra.mxu0 %v282
    %v284 = vand.u32 %v125, 4294901760
    %v285 = vsub.f32 %v125, %v284
    %286 = vmatpush.msra.mxu0 %v285
    %v287 = vand.u32 %v124, 4294901760
    %v288 = vsub.f32 %v124, %v287
    %289 = vmatpush.msra.mxu0 %v288
    %v290 = vand.u32 %v123, 4294901760
    %v291 = vsub.f32 %v123, %v290
    %292 = vmatpush.msra.mxu0 %v291
    %v293 = vand.u32 %v122, 4294901760
    %v294 = vsub.f32 %v122, %v293
    %295 = vmatpush.msra.mxu0 %v294
    %v296 = vand.u32 %v121, 4294901760
    %v297 = vsub.f32 %v121, %v296
    %298 = vmatpush.msra.mxu0 %v297
    %v299 = vand.u32 %v120, 4294901760
    %v300 = vsub.f32 %v120, %v299
    %301 = vmatpush.msra.mxu0 %v300
    %v302 = vand.u32 %v119, 4294901760
    %v303 = vsub.f32 %v119, %v302
    %304 = vmatpush.msra.mxu0 %v303
    %v305 = vand.u32 %v118, 4294901760
    %v306 = vsub.f32 %v118, %v305
    %307 = vmatpush.msra.mxu0 %v306
    %v308 = vand.u32 %v117, 4294901760
    %v309 = vsub.f32 %v117, %v308
    %310 = vmatpush.msra.mxu0 %v309
    %v311 = vand.u32 %v116, 4294901760
    %v312 = vsub.f32 %v116, %v311
    %313 = vmatpush.msra.mxu0 %v312
    %v314 = vand.u32 %v115, 4294901760
    %v315 = vsub.f32 %v115, %v314
    %316 = vmatpush.msra.mxu0 %v315
    %v317 = vand.u32 %v114, 4294901760
    %v318 = vsub.f32 %v114, %v317
    %319 = vmatpush.msra.mxu0 %v318
    %v320 = vand.u32 %v45, 4294901760
    %v321 = vsub.f32 %v45, %v320
    %322 = vmatmul.f32.gmra.mxu0 %v321
    %v323 = vpop.f32.mrf.mxu0
    %v324 = vadd.f32 %v270, %v323
    %325 = vdwg.mxu0
    %v326 = vand.u32 %v129, 4294901760
    %327 = vmatpush.msra.mxu0 %v326
    %v328 = vand.u32 %v128, 4294901760
    %329 = vmatpush.msra.mxu0 %v328
    %v330 = vand.u32 %v127, 4294901760
    %331 = vmatpush.msra.mxu0 %v330
    %v332 = vand.u32 %v126, 4294901760
    %333 = vmatpush.msra.mxu0 %v332
    %v334 = vand.u32 %v125, 4294901760
    %335 = vmatpush.msra.mxu0 %v334
    %v336 = vand.u32 %v124, 4294901760
    %337 = vmatpush.msra.mxu0 %v336
    %v338 = vand.u32 %v123, 4294901760
    %339 = vmatpush.msra.mxu0 %v338
    %v340 = vand.u32 %v122, 4294901760
    %341 = vmatpush.msra.mxu0 %v340
    %v342 = vand.u32 %v121, 4294901760
    %343 = vmatpush.msra.mxu0 %v342
    %v344 = vand.u32 %v120, 4294901760
    %345 = vmatpush.msra.mxu0 %v344
    %v346 = vand.u32 %v119, 4294901760
    %347 = vmatpush.msra.mxu0 %v346
    %v348 = vand.u32 %v118, 4294901760
    %349 = vmatpush.msra.mxu0 %v348
    %v350 = vand.u32 %v117, 4294901760
    %351 = vmatpush.msra.mxu0 %v350
    %v352 = vand.u32 %v116, 4294901760
    %353 = vmatpush.msra.mxu0 %v352
    %v354 = vand.u32 %v115, 4294901760
    %355 = vmatpush.msra.mxu0 %v354
    %v356 = vand.u32 %v114, 4294901760
    %357 = vmatpush.msra.mxu0 %v356
    %v358 = vand.u32 %v45, 4294901760
    %v359 = vsub.f32 %v45, %v358
    %v360 = vand.u32 %v359, 4294901760
    %361 = vmatmul.f32.gmra.mxu0 %v360
    %v362 = vpop.f32.mrf.mxu0
    %v363 = vadd.f32 %v324, %v362
    %364 = vdwg.mxu0
    %v365 = vand.u32 %v129, 4294901760
    %v366 = vsub.f32 %v129, %v365
    %v367 = vand.u32 %v366, 4294901760
    %368 = vmatpush.msra.mxu0 %v367
    %v369 = vand.u32 %v128, 4294901760
    %v370 = vsub.f32 %v128, %v369
    %v371 = vand.u32 %v370, 4294901760
    %372 = vmatpush.msra.mxu0 %v371
    %v373 = vand.u32 %v127, 4294901760
    %v374 = vsub.f32 %v127, %v373
    %v375 = vand.u32 %v374, 4294901760
    %376 = vmatpush.msra.mxu0 %v375
    %v377 = vand.u32 %v126, 4294901760
    %v378 = vsub.f32 %v126, %v377
    %v379 = vand.u32 %v378, 4294901760
    %380 = vmatpush.msra.mxu0 %v379
    %v381 = vand.u32 %v125, 4294901760
    %v382 = vsub.f32 %v125, %v381
    %v383 = vand.u32 %v382, 4294901760
    %384 = vmatpush.msra.mxu0 %v383
    %v385 = vand.u32 %v124, 4294901760
    %v386 = vsub.f32 %v124, %v385
    %v387 = vand.u32 %v386, 4294901760
    %388 = vmatpush.msra.mxu0 %v387
    %v389 = vand.u32 %v123, 4294901760
    %v390 = vsub.f32 %v123, %v389
    %v391 = vand.u32 %v390, 4294901760
    %392 = vmatpush.msra.mxu0 %v391
    %v393 = vand.u32 %v122, 4294901760
    %v394 = vsub.f32 %v122, %v393
    %v395 = vand.u32 %v394, 4294901760
    %396 = vmatpush.msra.mxu0 %v395
    %v397 = vand.u32 %v121, 4294901760
    %v398 = vsub.f32 %v121, %v397
    %v399 = vand.u32 %v398, 4294901760
    %400 = vmatpush.msra.mxu0 %v399
    %v401 = vand.u32 %v120, 4294901760
    %v402 = vsub.f32 %v120, %v401
    %v403 = vand.u32 %v402, 4294901760
    %404 = vmatpush.msra.mxu0 %v403
    %v405 = vand.u32 %v119, 4294901760
    %v406 = vsub.f32 %v119, %v405
    %v407 = vand.u32 %v406, 4294901760
    %408 = vmatpush.msra.mxu0 %v407
    %v409 = vand.u32 %v118, 4294901760
    %v410 = vsub.f32 %v118, %v409
    %v411 = vand.u32 %v410, 4294901760
    %412 = vmatpush.msra.mxu0 %v411
    %v413 = vand.u32 %v117, 4294901760
    %v414 = vsub.f32 %v117, %v413
    %v415 = vand.u32 %v414, 4294901760
    %416 = vmatpush.msra.mxu0 %v415
    %v417 = vand.u32 %v116, 4294901760
    %v418 = vsub.f32 %v116, %v417
    %v419 = vand.u32 %v418, 4294901760
    %420 = vmatpush.msra.mxu0 %v419
    %v421 = vand.u32 %v115, 4294901760
    %v422 = vsub.f32 %v115, %v421
    %v423 = vand.u32 %v422, 4294901760
    %424 = vmatpush.msra.mxu0 %v423
    %v425 = vand.u32 %v114, 4294901760
    %v426 = vsub.f32 %v114, %v425
    %v427 = vand.u32 %v426, 4294901760
    %428 = vmatpush.msra.mxu0 %v427
    %v429 = vand.u32 %v45, 4294901760
    %430 = vmatmul.f32.gmra.mxu0 %v429
    %v431 = vpop.f32.mrf.mxu0
    %v432 = vadd.f32 %v363, %v431
    %433 = vdwg.mxu0
    %v434 = vand.u32 %v129, 4294901760
    %435 = vmatpush.msra.mxu0 %v434
    %v436 = vand.u32 %v128, 4294901760
    %437 = vmatpush.msra.mxu0 %v436
    %v438 = vand.u32 %v127, 4294901760
    %439 = vmatpush.msra.mxu0 %v438
    %v440 = vand.u32 %v126, 4294901760
    %441 = vmatpush.msra.mxu0 %v440
    %v442 = vand.u32 %v125, 4294901760
    %443 = vmatpush.msra.mxu0 %v442
    %v444 = vand.u32 %v124, 4294901760
    %445 = vmatpush.msra.mxu0 %v444
    %v446 = vand.u32 %v123, 4294901760
    %447 = vmatpush.msra.mxu0 %v446
    %v448 = vand.u32 %v122, 4294901760
    %449 = vmatpush.msra.mxu0 %v448
    %v450 = vand.u32 %v121, 4294901760
    %451 = vmatpush.msra.mxu0 %v450
    %v452 = vand.u32 %v120, 4294901760
    %453 = vmatpush.msra.mxu0 %v452
    %v454 = vand.u32 %v119, 4294901760
    %455 = vmatpush.msra.mxu0 %v454
    %v456 = vand.u32 %v118, 4294901760
    %457 = vmatpush.msra.mxu0 %v456
    %v458 = vand.u32 %v117, 4294901760
    %459 = vmatpush.msra.mxu0 %v458
    %v460 = vand.u32 %v116, 4294901760
    %461 = vmatpush.msra.mxu0 %v460
    %v462 = vand.u32 %v115, 4294901760
    %463 = vmatpush.msra.mxu0 %v462
    %v464 = vand.u32 %v114, 4294901760
    %465 = vmatpush.msra.mxu0 %v464
    %v466 = vand.u32 %v45, 4294901760
    %467 = vmatmul.f32.gmra.mxu0 %v466
    %v468 = vpop.f32.mrf.mxu0
    %v469 = vadd.f32 %v432, %v468
    %470 = vdwg.mxu0
    %v471 = vmul.f32 %v469, 0.03125
    %v472 = vsub.f32 %v45, %v471
    %v473 = vmul.f32 %v472, %v472
    %v474 = vand.u32 %v129, 4294901760
    %475 = vmatpush.msra.mxu0 %v474
    %v476 = vand.u32 %v128, 4294901760
    %477 = vmatpush.msra.mxu0 %v476
    %v478 = vand.u32 %v127, 4294901760
    %479 = vmatpush.msra.mxu0 %v478
    %v480 = vand.u32 %v126, 4294901760
    %481 = vmatpush.msra.mxu0 %v480
    %v482 = vand.u32 %v125, 4294901760
    %483 = vmatpush.msra.mxu0 %v482
    %v484 = vand.u32 %v124, 4294901760
    %485 = vmatpush.msra.mxu0 %v484
    %v486 = vand.u32 %v123, 4294901760
    %487 = vmatpush.msra.mxu0 %v486
    %v488 = vand.u32 %v122, 4294901760
    %489 = vmatpush.msra.mxu0 %v488
    %v490 = vand.u32 %v121, 4294901760
    %491 = vmatpush.msra.mxu0 %v490
    %v492 = vand.u32 %v120, 4294901760
    %493 = vmatpush.msra.mxu0 %v492
    %v494 = vand.u32 %v119, 4294901760
    %495 = vmatpush.msra.mxu0 %v494
    %v496 = vand.u32 %v118, 4294901760
    %497 = vmatpush.msra.mxu0 %v496
    %v498 = vand.u32 %v117, 4294901760
    %499 = vmatpush.msra.mxu0 %v498
    %v500 = vand.u32 %v116, 4294901760
    %501 = vmatpush.msra.mxu0 %v500
    %v502 = vand.u32 %v115, 4294901760
    %503 = vmatpush.msra.mxu0 %v502
    %v504 = vand.u32 %v114, 4294901760
    %505 = vmatpush.msra.mxu0 %v504
    %v506 = vand.u32 %v473, 4294901760
    %v507 = vsub.f32 %v473, %v506
    %v508 = vand.u32 %v507, 4294901760
    %v509 = vsub.f32 %v507, %v508
    %v510 = vand.u32 %v509, 4294901760
    %511 = vmatmul.f32.gmra.mxu0 %v510
    %v512 = vpop.f32.mrf.mxu0
    %v513 = vadd.f32 0.0, %v512
    %514 = vdwg.mxu0
    %v515 = vand.u32 %v129, 4294901760
    %v516 = vsub.f32 %v129, %v515
    %v517 = vand.u32 %v516, 4294901760
    %v518 = vsub.f32 %v516, %v517
    %v519 = vand.u32 %v518, 4294901760
    %520 = vmatpush.msra.mxu0 %v519
    %v521 = vand.u32 %v128, 4294901760
    %v522 = vsub.f32 %v128, %v521
    %v523 = vand.u32 %v522, 4294901760
    %v524 = vsub.f32 %v522, %v523
    %v525 = vand.u32 %v524, 4294901760
    %526 = vmatpush.msra.mxu0 %v525
    %v527 = vand.u32 %v127, 4294901760
    %v528 = vsub.f32 %v127, %v527
    %v529 = vand.u32 %v528, 4294901760
    %v530 = vsub.f32 %v528, %v529
    %v531 = vand.u32 %v530, 4294901760
    %532 = vmatpush.msra.mxu0 %v531
    %v533 = vand.u32 %v126, 4294901760
    %v534 = vsub.f32 %v126, %v533
    %v535 = vand.u32 %v534, 4294901760
    %v536 = vsub.f32 %v534, %v535
    %v537 = vand.u32 %v536, 4294901760
    %538 = vmatpush.msra.mxu0 %v537
    %v539 = vand.u32 %v125, 4294901760
    %v540 = vsub.f32 %v125, %v539
    %v541 = vand.u32 %v540, 4294901760
    %v542 = vsub.f32 %v540, %v541
    %v543 = vand.u32 %v542, 4294901760
    %544 = vmatpush.msra.mxu0 %v543
    %v545 = vand.u32 %v124, 4294901760
    %v546 = vsub.f32 %v124, %v545
    %v547 = vand.u32 %v546, 4294901760
    %v548 = vsub.f32 %v546, %v547
    %v549 = vand.u32 %v548, 4294901760
    %550 = vmatpush.msra.mxu0 %v549
    %v551 = vand.u32 %v123, 4294901760
    %v552 = vsub.f32 %v123, %v551
    %v553 = vand.u32 %v552, 4294901760
    %v554 = vsub.f32 %v552, %v553
    %v555 = vand.u32 %v554, 4294901760
    %556 = vmatpush.msra.mxu0 %v555
    %v557 = vand.u32 %v122, 4294901760
    %v558 = vsub.f32 %v122, %v557
    %v559 = vand.u32 %v558, 4294901760
    %v560 = vsub.f32 %v558, %v559
    %v561 = vand.u32 %v560, 4294901760
    %562 = vmatpush.msra.mxu0 %v561
    %v563 = vand.u32 %v121, 4294901760
    %v564 = vsub.f32 %v121, %v563
    %v565 = vand.u32 %v564, 4294901760
    %v566 = vsub.f32 %v564, %v565
    %v567 = vand.u32 %v566, 4294901760
    %568 = vmatpush.msra.mxu0 %v567
    %v569 = vand.u32 %v120, 4294901760
    %v570 = vsub.f32 %v120, %v569
    %v571 = vand.u32 %v570, 4294901760
    %v572 = vsub.f32 %v570, %v571
    %v573 = vand.u32 %v572, 4294901760
    %574 = vmatpush.msra.mxu0 %v573
    %v575 = vand.u32 %v119, 4294901760
    %v576 = vsub.f32 %v119, %v575
    %v577 = vand.u32 %v576, 4294901760
    %v578 = vsub.f32 %v576, %v577
    %v579 = vand.u32 %v578, 4294901760
    %580 = vmatpush.msra.mxu0 %v579
    %v581 = vand.u32 %v118, 4294901760
    %v582 = vsub.f32 %v118, %v581
    %v583 = vand.u32 %v582, 4294901760
    %v584 = vsub.f32 %v582, %v583
    %v585 = vand.u32 %v584, 4294901760
    %586 = vmatpush.msra.mxu0 %v585
    %v587 = vand.u32 %v117, 4294901760
    %v588 = vsub.f32 %v117, %v587
    %v589 = vand.u32 %v588, 4294901760
    %v590 = vsub.f32 %v588, %v589
    %v591 = vand.u32 %v590, 4294901760
    %592 = vmatpush.msra.mxu0 %v591
    %v593 = vand.u32 %v116, 4294901760
    %v594 = vsub.f32 %v116, %v593
    %v595 = vand.u32 %v594, 4294901760
    %v596 = vsub.f32 %v594, %v595
    %v597 = vand.u32 %v596, 4294901760
    %598 = vmatpush.msra.mxu0 %v597
    %v599 = vand.u32 %v115, 4294901760
    %v600 = vsub.f32 %v115, %v599
    %v601 = vand.u32 %v600, 4294901760
    %v602 = vsub.f32 %v600, %v601
    %v603 = vand.u32 %v602, 4294901760
    %604 = vmatpush.msra.mxu0 %v603
    %v605 = vand.u32 %v114, 4294901760
    %v606 = vsub.f32 %v114, %v605
    %v607 = vand.u32 %v606, 4294901760
    %v608 = vsub.f32 %v606, %v607
    %v609 = vand.u32 %v608, 4294901760
    %610 = vmatpush.msra.mxu0 %v609
    %v611 = vand.u32 %v473, 4294901760
    %612 = vmatmul.f32.gmra.mxu0 %v611
    %v613 = vpop.f32.mrf.mxu0
    %v614 = vadd.f32 %v513, %v613
    %615 = vdwg.mxu0
    %v616 = vand.u32 %v129, 4294901760
    %v617 = vsub.f32 %v129, %v616
    %618 = vmatpush.msra.mxu0 %v617
    %v619 = vand.u32 %v128, 4294901760
    %v620 = vsub.f32 %v128, %v619
    %621 = vmatpush.msra.mxu0 %v620
    %v622 = vand.u32 %v127, 4294901760
    %v623 = vsub.f32 %v127, %v622
    %624 = vmatpush.msra.mxu0 %v623
    %v625 = vand.u32 %v126, 4294901760
    %v626 = vsub.f32 %v126, %v625
    %627 = vmatpush.msra.mxu0 %v626
    %v628 = vand.u32 %v125, 4294901760
    %v629 = vsub.f32 %v125, %v628
    %630 = vmatpush.msra.mxu0 %v629
    %v631 = vand.u32 %v124, 4294901760
    %v632 = vsub.f32 %v124, %v631
    %633 = vmatpush.msra.mxu0 %v632
    %v634 = vand.u32 %v123, 4294901760
    %v635 = vsub.f32 %v123, %v634
    %636 = vmatpush.msra.mxu0 %v635
    %v637 = vand.u32 %v122, 4294901760
    %v638 = vsub.f32 %v122, %v637
    %639 = vmatpush.msra.mxu0 %v638
    %v640 = vand.u32 %v121, 4294901760
    %v641 = vsub.f32 %v121, %v640
    %642 = vmatpush.msra.mxu0 %v641
    %v643 = vand.u32 %v120, 4294901760
    %v644 = vsub.f32 %v120, %v643
    %645 = vmatpush.msra.mxu0 %v644
    %v646 = vand.u32 %v119, 4294901760
    %v647 = vsub.f32 %v119, %v646
    %648 = vmatpush.msra.mxu0 %v647
    %v649 = vand.u32 %v118, 4294901760
    %v650 = vsub.f32 %v118, %v649
    %651 = vmatpush.msra.mxu0 %v650
    %v652 = vand.u32 %v117, 4294901760
    %v653 = vsub.f32 %v117, %v652
    %654 = vmatpush.msra.mxu0 %v653
    %v655 = vand.u32 %v116, 4294901760
    %v656 = vsub.f32 %v116, %v655
    %657 = vmatpush.msra.mxu0 %v656
    %v658 = vand.u32 %v115, 4294901760
    %v659 = vsub.f32 %v115, %v658
    %660 = vmatpush.msra.mxu0 %v659
    %v661 = vand.u32 %v114, 4294901760
    %v662 = vsub.f32 %v114, %v661
    %663 = vmatpush.msra.mxu0 %v662
    %v664 = vand.u32 %v473, 4294901760
    %v665 = vsub.f32 %v473, %v664
    %666 = vmatmul.f32.gmra.mxu0 %v665
    %v667 = vpop.f32.mrf.mxu0
    %v668 = vadd.f32 %v614, %v667
    %669 = vdwg.mxu0
    %v670 = vand.u32 %v129, 4294901760
    %671 = vmatpush.msra.mxu0 %v670
    %v672 = vand.u32 %v128, 4294901760
    %673 = vmatpush.msra.mxu0 %v672
    %v674 = vand.u32 %v127, 4294901760
    %675 = vmatpush.msra.mxu0 %v674
    %v676 = vand.u32 %v126, 4294901760
    %677 = vmatpush.msra.mxu0 %v676
    %v678 = vand.u32 %v125, 4294901760
    %679 = vmatpush.msra.mxu0 %v678
    %v680 = vand.u32 %v124, 4294901760
    %681 = vmatpush.msra.mxu0 %v680
    %v682 = vand.u32 %v123, 4294901760
    %683 = vmatpush.msra.mxu0 %v682
    %v684 = vand.u32 %v122, 4294901760
    %685 = vmatpush.msra.mxu0 %v684
    %v686 = vand.u32 %v121, 4294901760
    %687 = vmatpush.msra.mxu0 %v686
    %v688 = vand.u32 %v120, 4294901760
    %689 = vmatpush.msra.mxu0 %v688
    %v690 = vand.u32 %v119, 4294901760
    %691 = vmatpush.msra.mxu0 %v690
    %v692 = vand.u32 %v118, 4294901760
    %693 = vmatpush.msra.mxu0 %v692
    %v694 = vand.u32 %v117, 4294901760
    %695 = vmatpush.msra.mxu0 %v694
    %v696 = vand.u32 %v116, 4294901760
    %697 = vmatpush.msra.mxu0 %v696
    %v698 = vand.u32 %v115, 4294901760
    %699 = vmatpush.msra.mxu0 %v698
    %v700 = vand.u32 %v114, 4294901760
    %701 = vmatpush.msra.mxu0 %v700
    %v702 = vand.u32 %v473, 4294901760
    %v703 = vsub.f32 %v473, %v702
    %v704 = vand.u32 %v703, 4294901760
    %705 = vmatmul.f32.gmra.mxu0 %v704
    %v706 = vpop.f32.mrf.mxu0
    %v707 = vadd.f32 %v668, %v706
    %708 = vdwg.mxu0
    %v709 = vand.u32 %v129, 4294901760
    %v710 = vsub.f32 %v129, %v709
    %v711 = vand.u32 %v710, 4294901760
    %712 = vmatpush.msra.mxu0 %v711
    %v713 = vand.u32 %v128, 4294901760
    %v714 = vsub.f32 %v128, %v713
    %v715 = vand.u32 %v714, 4294901760
    %716 = vmatpush.msra.mxu0 %v715
    %v717 = vand.u32 %v127, 4294901760
    %v718 = vsub.f32 %v127, %v717
    %v719 = vand.u32 %v718, 4294901760
    %720 = vmatpush.msra.mxu0 %v719
    %v721 = vand.u32 %v126, 4294901760
    %v722 = vsub.f32 %v126, %v721
    %v723 = vand.u32 %v722, 4294901760
    %724 = vmatpush.msra.mxu0 %v723
    %v725 = vand.u32 %v125, 4294901760
    %v726 = vsub.f32 %v125, %v725
    %v727 = vand.u32 %v726, 4294901760
    %728 = vmatpush.msra.mxu0 %v727
    %v729 = vand.u32 %v124, 4294901760
    %v730 = vsub.f32 %v124, %v729
    %v731 = vand.u32 %v730, 4294901760
    %732 = vmatpush.msra.mxu0 %v731
    %v733 = vand.u32 %v123, 4294901760
    %v734 = vsub.f32 %v123, %v733
    %v735 = vand.u32 %v734, 4294901760
    %736 = vmatpush.msra.mxu0 %v735
    %v737 = vand.u32 %v122, 4294901760
    %v738 = vsub.f32 %v122, %v737
    %v739 = vand.u32 %v738, 4294901760
    %740 = vmatpush.msra.mxu0 %v739
    %v741 = vand.u32 %v121, 4294901760
    %v742 = vsub.f32 %v121, %v741
    %v743 = vand.u32 %v742, 4294901760
    %744 = vmatpush.msra.mxu0 %v743
    %v745 = vand.u32 %v120, 4294901760
    %v746 = vsub.f32 %v120, %v745
    %v747 = vand.u32 %v746, 4294901760
    %748 = vmatpush.msra.mxu0 %v747
    %v749 = vand.u32 %v119, 4294901760
    %v750 = vsub.f32 %v119, %v749
    %v751 = vand.u32 %v750, 4294901760
    %752 = vmatpush.msra.mxu0 %v751
    %v753 = vand.u32 %v118, 4294901760
    %v754 = vsub.f32 %v118, %v753
    %v755 = vand.u32 %v754, 4294901760
    %756 = vmatpush.msra.mxu0 %v755
    %v757 = vand.u32 %v117, 4294901760
    %v758 = vsub.f32 %v117, %v757
    %v759 = vand.u32 %v758, 4294901760
    %760 = vmatpush.msra.mxu0 %v759
    %v761 = vand.u32 %v116, 4294901760
    %v762 = vsub.f32 %v116, %v761
    %v763 = vand.u32 %v762, 4294901760
    %764 = vmatpush.msra.mxu0 %v763
    %v765 = vand.u32 %v115, 4294901760
    %v766 = vsub.f32 %v115, %v765
    %v767 = vand.u32 %v766, 4294901760
    %768 = vmatpush.msra.mxu0 %v767
    %v769 = vand.u32 %v114, 4294901760
    %v770 = vsub.f32 %v114, %v769
    %v771 = vand.u32 %v770, 4294901760
    %772 = vmatpush.msra.mxu0 %v771
    %v773 = vand.u32 %v473, 4294901760
    %774 = vmatmul.f32.gmra.mxu0 %v773
    %v775 = vpop.f32.mrf.mxu0
    %v776 = vadd.f32 %v707, %v775
    %777 = vdwg.mxu0
    %v778 = vand.u32 %v129, 4294901760
    %779 = vmatpush.msra.mxu0 %v778
    %v780 = vand.u32 %v128, 4294901760
    %781 = vmatpush.msra.mxu0 %v780
    %v782 = vand.u32 %v127, 4294901760
    %783 = vmatpush.msra.mxu0 %v782
    %v784 = vand.u32 %v126, 4294901760
    %785 = vmatpush.msra.mxu0 %v784
    %v786 = vand.u32 %v125, 4294901760
    %787 = vmatpush.msra.mxu0 %v786
    %v788 = vand.u32 %v124, 4294901760
    %789 = vmatpush.msra.mxu0 %v788
    %v790 = vand.u32 %v123, 4294901760
    %791 = vmatpush.msra.mxu0 %v790
    %v792 = vand.u32 %v122, 4294901760
    %793 = vmatpush.msra.mxu0 %v792
    %v794 = vand.u32 %v121, 4294901760
    %795 = vmatpush.msra.mxu0 %v794
    %v796 = vand.u32 %v120, 4294901760
    %797 = vmatpush.msra.mxu0 %v796
    %v798 = vand.u32 %v119, 4294901760
    %799 = vmatpush.msra.mxu0 %v798
    %v800 = vand.u32 %v118, 4294901760
    %801 = vmatpush.msra.mxu0 %v800
    %v802 = vand.u32 %v117, 4294901760
    %803 = vmatpush.msra.mxu0 %v802
    %v804 = vand.u32 %v116, 4294901760
    %805 = vmatpush.msra.mxu0 %v804
    %v806 = vand.u32 %v115, 4294901760
    %807 = vmatpush.msra.mxu0 %v806
    %v808 = vand.u32 %v114, 4294901760
    %809 = vmatpush.msra.mxu0 %v808
    %v810 = vand.u32 %v473, 4294901760
    %811 = vmatmul.f32.gmra.mxu0 %v810
    %v812 = vpop.f32.mrf.mxu0
    %v813 = vadd.f32 %v776, %v812
    %814 = vdwg.mxu0
    %v815 = vmul.f32 %v813, 0.03125
    %v816 = vadd.f32 %v815, 1e-05
    %v817 = vrsqrt.pop %v816
    %v818 = vmul.f32 %v817, %v816
    %v819 = vmul.f32 %v818, %v817
    %v820 = vmul.f32 0.5, %v819
    %v821 = vsub.f32 1.5, %v820
    %v822 = vmul.f32 %v817, %v821
    %vm823 = vweird.f32 %v816
    %vm824 = vweird.f32 %v817
    %vm825 = vmor %vm823, %vm824
    %v826 = vsel %vm825, %v817, %v822
    %v827 = vld [vmem:[#allocation5] sm:$0x1]
    %v828 = vld [vmem:[%s2] sm:$0x1]
    %v829 = vmul.f32 %v472, %v826
    %v831 = vperm.slane %v827, 0
    %v833 = vmul.f32 %v829, %v831
    %v835 = vperm.slane %v828, 0
    %v837 = vadd.f32 %v833, %v835
    %838 = vst [vmem:[#allocation7] sm:$0xff] %v837
    // Predicated region
    $region22: #{tpu_custom_call.1} parent=1 // pred_check
      _
    $region23: #{tpu_custom_call.1} parent=1 // pred_check_branch
      %840 = sbr.rel (0) target = $region25
    $region24: #{tpu_custom_call.1} parent=1 // pred_region
      %842 = vsyncadd [#allocation4], 64
      %s843 = sshll.u32 [#allocation7], 4
      %s844 = int_to_ptr.vmem [resolvable:$true] %s843
      %s845 = sshll.u32 %s3, 4
      %s846 = int_to_ptr.hbm [resolvable:$true] %s845
      %851 = dma.vmem_to_hbm [thread:$0]  %s844, 64, %s846, [#allocation4], 64, 64, 4
    $region25: #{tpu_custom_call.1} parent=1 // pred_fallthru
      _
    // Predicated region
    $region26: #{tpu_custom_call.1} parent=1 // pred_check
      _
    $region27: #{tpu_custom_call.1} parent=1 // pred_check_branch
      %853 = sbr.rel (0) target = $region29
    $region28: #{tpu_custom_call.1} parent=1 // pred_region
      %855 = dma.done [#allocation4], 128
    $region29: #{tpu_custom_call.1} parent=1 // pred_fallthru
      _
    %856 = vsyncpa [#allocation3], 1
    %857 = vsyncpa [#allocation6], 1
    %858 = vsyncpa [#allocation4], 1

</llo_original>
